<compile_context>
chip_gen: v5e
topology: v5e:2x2
jax: 0.10.0
libtpu: 0.0.40
codegen_flags: <defaults>
</compile_context>

<pallas_src>
import jax
import jax.numpy as jnp
from jax.experimental import pallas as pl
from jax.experimental.pallas import tpu as pltpu


def encoder_gru_kernel(onehot_ref, proj_ref, whh_ref, b_ref, out_ref, hN_ref):
    """Whole Embedding+GRU forward in one invocation (everything resident in VMEM).

    onehot_ref : (S*B, V) f32   one-hot token rows, time-major (row = t*B + b)
    proj_ref   : (V, 3H)  f32   emb_table @ [W_ir | W_iz | W_in]  (pre-folded)
    whh_ref    : (H, 3H)  f32   [W_hr | W_hz | W_hn] (pre-transposed, lane-concat)
    b_ref      : (2, 3H)  f32   row0 = [b_ir+b_hr | b_iz+b_hz | b_in]
                                row1 = [0 | 0 | b_hn]   (stays inside r * (.))
    out_ref    : (B, S*H) f32   lane-dense output slab (reshaped to (B,S,H) outside)
    hN_ref     : (1, B, H) f32  final hidden state
    """
    S_B = onehot_ref.shape[0]
    H3 = proj_ref.shape[1]
    H = H3 // 3
    B = hN_ref.shape[1]
    S = S_B // B

    w_hh = whh_ref[...]                # (H, 3H), loaded once
    b_gi = b_ref[0:1, :]               # (1, 3H)
    b_gh = b_ref[1:2, :]               # (1, 3H), nonzero only on n lanes

    # ---- all-timestep input projections in ONE matmul (gather + W_ih folded) ----
    gi_all = jnp.dot(onehot_ref[...], proj_ref[...],
                     preferred_element_type=jnp.float32) + b_gi       # (S*B, 3H)

    # ---- serial GRU recurrence, fully unrolled (S small & static) ----
    h = jnp.zeros((B, H), dtype=jnp.float32)
    hs = []
    for t in range(S):
        gi = gi_all[t * B:(t + 1) * B, :]                             # (B, 3H)
        # single MXU push on the serial path + per-step hidden bias (n lanes only)
        gh = jnp.dot(h, w_hh, preferred_element_type=jnp.float32) + b_gh

        # fused r|z sigmoid: one EUP push over (B, 2H)
        rz = jax.nn.sigmoid(gi[:, :2 * H] + gh[:, :2 * H])
        r = rz[:, :H]
        z = rz[:, H:2 * H]
        n = jnp.tanh(gi[:, 2 * H:] + r * gh[:, 2 * H:])               # b_hn inside r*(.)
        h = (1.0 - z) * n + z * h
        hs.append(h)

    # single lane-dense store: out[b, t*H:(t+1)*H] = h_t[b]
    out_ref[...] = jnp.concatenate(hs, axis=-1)                       # (B, S*H)
    hN_ref[0] = h


def _encoder_forward(tokens, proj_table, w_hh_cat, b_stack):
    """tokens: (B, S) int32. Returns (output (B,S,H), h_n (1,B,H))."""
    B, S = tokens.shape
    V = proj_table.shape[0]
    H = w_hh_cat.shape[0]

    # time-major row ordering: row t*B + b holds tokens[b, t]; one-hot in wrapper
    tok_tm = jnp.transpose(tokens, (1, 0)).reshape(S * B)
    one_hot = jax.nn.one_hot(tok_tm, V, dtype=jnp.float32)            # (S*B, V)

    out_flat, h_n = pl.pallas_call(
        encoder_gru_kernel,
        out_shape=(
            jax.ShapeDtypeStruct((B, S * H), jnp.float32),
            jax.ShapeDtypeStruct((1, B, H), jnp.float32),
        ),
        grid_spec=pltpu.PrefetchScalarGridSpec(
            num_scalar_prefetch=0,
            grid=(1,),
            in_specs=[
                pl.BlockSpec((S * B, V), lambda i: (0, 0)),      # one-hot tokens
                pl.BlockSpec((V, 3 * H), lambda i: (0, 0)),      # emb @ W_ih (pre-folded)
                pl.BlockSpec((H, 3 * H), lambda i: (0, 0)),      # W_hh (lane-concat)
                pl.BlockSpec((2, 3 * H), lambda i: (0, 0)),      # folded biases
            ],
            out_specs=[
                pl.BlockSpec((B, S * H), lambda i: (0, 0)),
                pl.BlockSpec((1, B, H), lambda i: (0, 0, 0)),
            ],
        ),
        compiler_params=pltpu.CompilerParams(
            dimension_semantics=("arbitrary",)),                 # serial recurrence
    )(one_hot, proj_table, w_hh_cat, b_stack)

    output = out_flat.reshape(B, S, H)                           # batch_first, free reshape
    return output, h_n


encoder_forward = jax.jit(_encoder_forward)


class EncoderPallas:
    """JAX/Pallas equivalent of the PyTorch Encoder (GRU, num_layers=1)."""

    def __init__(self, input_size, params, key):
        self.input_size = input_size
        self.hidden_size = params['hidden_layer_size']
        self.embedding_size = params['embedding_size']
        self.params = params
        assert params['cell_type'] == 'GRU' and params['num_layers'] == 1

        H, E, V = self.hidden_size, self.embedding_size, input_size
        k_emb, k_wih, k_whh, k_bih, k_bhh = jax.random.split(key, 5)

        # nn.Embedding default init: N(0, 1)
        embedding = jax.random.normal(k_emb, (V, E), dtype=jnp.float32)

        # nn.GRU default init: U(-1/sqrt(H), 1/sqrt(H)); PyTorch layout (3H, E)/(3H, H)
        bound = 1.0 / float(H) ** 0.5
        w_ih = jax.random.uniform(k_wih, (3 * H, E), jnp.float32, -bound, bound)
        w_hh = jax.random.uniform(k_whh, (3 * H, H), jnp.float32, -bound, bound)
        b_ih = jax.random.uniform(k_bih, (3 * H,), jnp.float32, -bound, bound)
        b_hh = jax.random.uniform(k_bhh, (3 * H,), jnp.float32, -bound, bound)

        # Lane-concatenated gate weights (gate order r, z, n as in PyTorch).
        w_ih_cat = jnp.concatenate(
            [w_ih[0:H].T, w_ih[H:2 * H].T, w_ih[2 * H:3 * H].T], axis=1)   # (E, 3H)
        self.w_hh_cat = jnp.concatenate(
            [w_hh[0:H].T, w_hh[H:2 * H].T, w_hh[2 * H:3 * H].T], axis=1)   # (H, 3H)

        # Pre-fold embedding gather + input projection: dropout is identity in
        # eval mode, so (emb @ W_ih) can be baked into one (V, 3H) table.
        self.proj_table = jnp.dot(embedding, w_ih_cat)                      # (V, 3H)

        # Folded biases: r/z biases combine; n-gate b_hn stays separate
        # (it must remain inside r * (W_hn h + b_hn), per PyTorch GRU).
        b_gi = jnp.concatenate(
            [b_ih[0:H] + b_hh[0:H],
             b_ih[H:2 * H] + b_hh[H:2 * H],
             b_ih[2 * H:3 * H]], axis=0)                                    # (3H,)
        b_gh = jnp.concatenate(
            [jnp.zeros((2 * H,), jnp.float32), b_hh[2 * H:3 * H]], axis=0)  # (3H,)
        self.b_stack = jnp.stack([b_gi, b_gh], axis=0)                      # (2, 3H)

    def __call__(self, input_tensor):
        # input_tensor: (B, S) int32 token ids
        # dropout: eval-mode identity (see TODO at top)
        return encoder_forward(input_tensor, self.proj_table,
                               self.w_hh_cat, self.b_stack)


if __name__ == "__main__":
    params = {
        'hidden_layer_size': 32,
        'embedding_size': 32,
        'cell_type': 'GRU',
        'num_layers': 1,
        'dropout': 0.1,
    }
    vocab = 16
    batch, seq = 2, 8

    key = jax.random.PRNGKey(0)
    k_init, k_data = jax.random.split(key)

    enc = EncoderPallas(vocab, params, k_init)
    tokens = jax.random.randint(k_data, (batch, seq), 0, vocab, dtype=jnp.int32)

    output, hidden_state = enc(tokens)
    jax.block_until_ready((output, hidden_state))

    assert output.shape == (batch, seq, params['hidden_layer_size'])
    assert hidden_state.shape == (params['num_layers'], batch, params['hidden_layer_size'])
    assert bool(jnp.all(jnp.isfinite(output)))
    print("KERNEL_OK")
</pallas_src>

<mosaic_0001>
module attributes {stable_mosaic.version = 11 : i64} {
  func.func @encoder_gru_kernel(%arg0: i32, %arg1: memref<16x16xf32, #tpu.memory_space<vmem>>, %arg2: memref<16x96xf32, #tpu.memory_space<vmem>>, %arg3: memref<32x96xf32, #tpu.memory_space<vmem>>, %arg4: memref<2x96xf32, #tpu.memory_space<vmem>>, %arg5: memref<2x256xf32, #tpu.memory_space<vmem>>, %arg6: memref<1x2x32xf32, #tpu.memory_space<vmem>>) attributes {dimension_semantics = [#tpu.dimension_semantics<arbitrary>], iteration_bounds = array<i64: 1>, scalar_prefetch = 0 : i64, scratch_operands = 0 : i64, tpu.core_type = #tpu.core_type<tc>, window_params = [{pipeline_mode = #tpu.pipeline_mode<synchronous>, transform_indices = @transform_0, window_bounds = array<i64: 16, 16>}, {pipeline_mode = #tpu.pipeline_mode<synchronous>, transform_indices = @transform_1, window_bounds = array<i64: 16, 96>}, {pipeline_mode = #tpu.pipeline_mode<synchronous>, transform_indices = @transform_2, window_bounds = array<i64: 32, 96>}, {pipeline_mode = #tpu.pipeline_mode<synchronous>, transform_indices = @transform_3, window_bounds = array<i64: 2, 96>}, {pipeline_mode = #tpu.pipeline_mode<synchronous>, transform_indices = @transform_4, window_bounds = array<i64: 2, 256>}, {pipeline_mode = #tpu.pipeline_mode<synchronous>, transform_indices = @transform_5, window_bounds = array<i64: 1, 2, 32>}]} {
    %c0 = arith.constant 0 : index
    %c0_0 = arith.constant 0 : index
    %0 = vector.load %arg3[%c0, %c0_0] : memref<32x96xf32, #tpu.memory_space<vmem>>, vector<32x96xf32>
    %c0_1 = arith.constant 0 : index
    %c0_2 = arith.constant 0 : index
    %1 = vector.load %arg4[%c0_1, %c0_2] : memref<2x96xf32, #tpu.memory_space<vmem>>, vector<1x96xf32>
    %c1 = arith.constant 1 : index
    %c0_3 = arith.constant 0 : index
    %2 = vector.load %arg4[%c1, %c0_3] : memref<2x96xf32, #tpu.memory_space<vmem>>, vector<1x96xf32>
    %c0_4 = arith.constant 0 : index
    %c0_5 = arith.constant 0 : index
    %3 = vector.load %arg1[%c0_4, %c0_5] : memref<16x16xf32, #tpu.memory_space<vmem>>, vector<16x16xf32>
    %c0_6 = arith.constant 0 : index
    %c0_7 = arith.constant 0 : index
    %4 = vector.load %arg2[%c0_6, %c0_7] : memref<16x96xf32, #tpu.memory_space<vmem>>, vector<16x96xf32>
    %cst = arith.constant dense<0.000000e+00> : vector<16x96xf32>
    %5 = tpu.matmul %3, %4, %cst {dimension_numbers = #tpu.dot_dimension_numbers<[1], [0], [0], [1], [0, 0, 1, 1], [], []>} : vector<16x16xf32>, vector<16x96xf32>, vector<16x96xf32> -> vector<16x96xf32>
    %6 = vector.broadcast %1 : vector<1x96xf32> to vector<16x96xf32>
    %7 = arith.addf %5, %6 : vector<16x96xf32>
    %cst_8 = arith.constant 0.000000e+00 : f32
    %8 = vector.broadcast %cst_8 : f32 to vector<2x32xf32>
    %9 = vector.extract_strided_slice %7 {offsets = [0, 0], sizes = [2, 96], strides = [1, 1]} : vector<16x96xf32> to vector<2x96xf32>
    %cst_9 = arith.constant dense<0.000000e+00> : vector<2x96xf32>
    %10 = tpu.matmul %8, %0, %cst_9 {dimension_numbers = #tpu.dot_dimension_numbers<[1], [0], [0], [1], [0, 0, 1, 1], [], []>} : vector<2x32xf32>, vector<32x96xf32>, vector<2x96xf32> -> vector<2x96xf32>
    %11 = vector.broadcast %2 : vector<1x96xf32> to vector<2x96xf32>
    %12 = arith.addf %10, %11 : vector<2x96xf32>
    %13 = vector.extract_strided_slice %9 {offsets = [0, 0], sizes = [2, 64], strides = [1, 1]} : vector<2x96xf32> to vector<2x64xf32>
    %14 = vector.extract_strided_slice %12 {offsets = [0, 0], sizes = [2, 64], strides = [1, 1]} : vector<2x96xf32> to vector<2x64xf32>
    %15 = arith.addf %13, %14 : vector<2x64xf32>
    %16 = arith.negf %15 : vector<2x64xf32>
    %17 = math.exp %16 : vector<2x64xf32>
    %cst_10 = arith.constant 1.000000e+00 : f32
    %18 = vector.broadcast %cst_10 : f32 to vector<2x64xf32>
    %19 = arith.addf %18, %17 : vector<2x64xf32>
    %20 = arith.divf %18, %19 : vector<2x64xf32>
    %21 = vector.extract_strided_slice %20 {offsets = [0, 0], sizes = [2, 32], strides = [1, 1]} : vector<2x64xf32> to vector<2x32xf32>
    %22 = vector.extract_strided_slice %20 {offsets = [0, 32], sizes = [2, 32], strides = [1, 1]} : vector<2x64xf32> to vector<2x32xf32>
    %23 = vector.extract_strided_slice %9 {offsets = [0, 64], sizes = [2, 32], strides = [1, 1]} : vector<2x96xf32> to vector<2x32xf32>
    %24 = vector.extract_strided_slice %12 {offsets = [0, 64], sizes = [2, 32], strides = [1, 1]} : vector<2x96xf32> to vector<2x32xf32>
    %25 = arith.mulf %21, %24 : vector<2x32xf32>
    %26 = arith.addf %23, %25 : vector<2x32xf32>
    %27 = math.tanh %26 : vector<2x32xf32>
    %cst_11 = arith.constant 1.000000e+00 : f32
    %28 = vector.broadcast %cst_11 : f32 to vector<2x32xf32>
    %29 = arith.subf %28, %22 : vector<2x32xf32>
    %30 = arith.mulf %29, %27 : vector<2x32xf32>
    %31 = arith.mulf %22, %8 : vector<2x32xf32>
    %32 = arith.addf %30, %31 : vector<2x32xf32>
    %33 = vector.extract_strided_slice %7 {offsets = [2, 0], sizes = [2, 96], strides = [1, 1]} : vector<16x96xf32> to vector<2x96xf32>
    %cst_12 = arith.constant dense<0.000000e+00> : vector<2x96xf32>
    %34 = tpu.matmul %32, %0, %cst_12 {dimension_numbers = #tpu.dot_dimension_numbers<[1], [0], [0], [1], [0, 0, 1, 1], [], []>} : vector<2x32xf32>, vector<32x96xf32>, vector<2x96xf32> -> vector<2x96xf32>
    %35 = vector.broadcast %2 : vector<1x96xf32> to vector<2x96xf32>
    %36 = arith.addf %34, %35 : vector<2x96xf32>
    %37 = vector.extract_strided_slice %33 {offsets = [0, 0], sizes = [2, 64], strides = [1, 1]} : vector<2x96xf32> to vector<2x64xf32>
    %38 = vector.extract_strided_slice %36 {offsets = [0, 0], sizes = [2, 64], strides = [1, 1]} : vector<2x96xf32> to vector<2x64xf32>
    %39 = arith.addf %37, %38 : vector<2x64xf32>
    %40 = arith.negf %39 : vector<2x64xf32>
    %41 = math.exp %40 : vector<2x64xf32>
    %cst_13 = arith.constant 1.000000e+00 : f32
    %42 = vector.broadcast %cst_13 : f32 to vector<2x64xf32>
    %43 = arith.addf %42, %41 : vector<2x64xf32>
    %44 = arith.divf %42, %43 : vector<2x64xf32>
    %45 = vector.extract_strided_slice %44 {offsets = [0, 0], sizes = [2, 32], strides = [1, 1]} : vector<2x64xf32> to vector<2x32xf32>
    %46 = vector.extract_strided_slice %44 {offsets = [0, 32], sizes = [2, 32], strides = [1, 1]} : vector<2x64xf32> to vector<2x32xf32>
    %47 = vector.extract_strided_slice %33 {offsets = [0, 64], sizes = [2, 32], strides = [1, 1]} : vector<2x96xf32> to vector<2x32xf32>
    %48 = vector.extract_strided_slice %36 {offsets = [0, 64], sizes = [2, 32], strides = [1, 1]} : vector<2x96xf32> to vector<2x32xf32>
    %49 = arith.mulf %45, %48 : vector<2x32xf32>
    %50 = arith.addf %47, %49 : vector<2x32xf32>
    %51 = math.tanh %50 : vector<2x32xf32>
    %cst_14 = arith.constant 1.000000e+00 : f32
    %52 = vector.broadcast %cst_14 : f32 to vector<2x32xf32>
    %53 = arith.subf %52, %46 : vector<2x32xf32>
    %54 = arith.mulf %53, %51 : vector<2x32xf32>
    %55 = arith.mulf %46, %32 : vector<2x32xf32>
    %56 = arith.addf %54, %55 : vector<2x32xf32>
    %57 = vector.extract_strided_slice %7 {offsets = [4, 0], sizes = [2, 96], strides = [1, 1]} : vector<16x96xf32> to vector<2x96xf32>
    %cst_15 = arith.constant dense<0.000000e+00> : vector<2x96xf32>
    %58 = tpu.matmul %56, %0, %cst_15 {dimension_numbers = #tpu.dot_dimension_numbers<[1], [0], [0], [1], [0, 0, 1, 1], [], []>} : vector<2x32xf32>, vector<32x96xf32>, vector<2x96xf32> -> vector<2x96xf32>
    %59 = vector.broadcast %2 : vector<1x96xf32> to vector<2x96xf32>
    %60 = arith.addf %58, %59 : vector<2x96xf32>
    %61 = vector.extract_strided_slice %57 {offsets = [0, 0], sizes = [2, 64], strides = [1, 1]} : vector<2x96xf32> to vector<2x64xf32>
    %62 = vector.extract_strided_slice %60 {offsets = [0, 0], sizes = [2, 64], strides = [1, 1]} : vector<2x96xf32> to vector<2x64xf32>
    %63 = arith.addf %61, %62 : vector<2x64xf32>
    %64 = arith.negf %63 : vector<2x64xf32>
    %65 = math.exp %64 : vector<2x64xf32>
    %cst_16 = arith.constant 1.000000e+00 : f32
    %66 = vector.broadcast %cst_16 : f32 to vector<2x64xf32>
    %67 = arith.addf %66, %65 : vector<2x64xf32>
    %68 = arith.divf %66, %67 : vector<2x64xf32>
    %69 = vector.extract_strided_slice %68 {offsets = [0, 0], sizes = [2, 32], strides = [1, 1]} : vector<2x64xf32> to vector<2x32xf32>
    %70 = vector.extract_strided_slice %68 {offsets = [0, 32], sizes = [2, 32], strides = [1, 1]} : vector<2x64xf32> to vector<2x32xf32>
    %71 = vector.extract_strided_slice %57 {offsets = [0, 64], sizes = [2, 32], strides = [1, 1]} : vector<2x96xf32> to vector<2x32xf32>
    %72 = vector.extract_strided_slice %60 {offsets = [0, 64], sizes = [2, 32], strides = [1, 1]} : vector<2x96xf32> to vector<2x32xf32>
    %73 = arith.mulf %69, %72 : vector<2x32xf32>
    %74 = arith.addf %71, %73 : vector<2x32xf32>
    %75 = math.tanh %74 : vector<2x32xf32>
    %cst_17 = arith.constant 1.000000e+00 : f32
    %76 = vector.broadcast %cst_17 : f32 to vector<2x32xf32>
    %77 = arith.subf %76, %70 : vector<2x32xf32>
    %78 = arith.mulf %77, %75 : vector<2x32xf32>
    %79 = arith.mulf %70, %56 : vector<2x32xf32>
    %80 = arith.addf %78, %79 : vector<2x32xf32>
    %81 = vector.extract_strided_slice %7 {offsets = [6, 0], sizes = [2, 96], strides = [1, 1]} : vector<16x96xf32> to vector<2x96xf32>
    %cst_18 = arith.constant dense<0.000000e+00> : vector<2x96xf32>
    %82 = tpu.matmul %80, %0, %cst_18 {dimension_numbers = #tpu.dot_dimension_numbers<[1], [0], [0], [1], [0, 0, 1, 1], [], []>} : vector<2x32xf32>, vector<32x96xf32>, vector<2x96xf32> -> vector<2x96xf32>
    %83 = vector.broadcast %2 : vector<1x96xf32> to vector<2x96xf32>
    %84 = arith.addf %82, %83 : vector<2x96xf32>
    %85 = vector.extract_strided_slice %81 {offsets = [0, 0], sizes = [2, 64], strides = [1, 1]} : vector<2x96xf32> to vector<2x64xf32>
    %86 = vector.extract_strided_slice %84 {offsets = [0, 0], sizes = [2, 64], strides = [1, 1]} : vector<2x96xf32> to vector<2x64xf32>
    %87 = arith.addf %85, %86 : vector<2x64xf32>
    %88 = arith.negf %87 : vector<2x64xf32>
    %89 = math.exp %88 : vector<2x64xf32>
    %cst_19 = arith.constant 1.000000e+00 : f32
    %90 = vector.broadcast %cst_19 : f32 to vector<2x64xf32>
    %91 = arith.addf %90, %89 : vector<2x64xf32>
    %92 = arith.divf %90, %91 : vector<2x64xf32>
    %93 = vector.extract_strided_slice %92 {offsets = [0, 0], sizes = [2, 32], strides = [1, 1]} : vector<2x64xf32> to vector<2x32xf32>
    %94 = vector.extract_strided_slice %92 {offsets = [0, 32], sizes = [2, 32], strides = [1, 1]} : vector<2x64xf32> to vector<2x32xf32>
    %95 = vector.extract_strided_slice %81 {offsets = [0, 64], sizes = [2, 32], strides = [1, 1]} : vector<2x96xf32> to vector<2x32xf32>
    %96 = vector.extract_strided_slice %84 {offsets = [0, 64], sizes = [2, 32], strides = [1, 1]} : vector<2x96xf32> to vector<2x32xf32>
    %97 = arith.mulf %93, %96 : vector<2x32xf32>
    %98 = arith.addf %95, %97 : vector<2x32xf32>
    %99 = math.tanh %98 : vector<2x32xf32>
    %cst_20 = arith.constant 1.000000e+00 : f32
    %100 = vector.broadcast %cst_20 : f32 to vector<2x32xf32>
    %101 = arith.subf %100, %94 : vector<2x32xf32>
    %102 = arith.mulf %101, %99 : vector<2x32xf32>
    %103 = arith.mulf %94, %80 : vector<2x32xf32>
    %104 = arith.addf %102, %103 : vector<2x32xf32>
    %105 = vector.extract_strided_slice %7 {offsets = [8, 0], sizes = [2, 96], strides = [1, 1]} : vector<16x96xf32> to vector<2x96xf32>
    %cst_21 = arith.constant dense<0.000000e+00> : vector<2x96xf32>
    %106 = tpu.matmul %104, %0, %cst_21 {dimension_numbers = #tpu.dot_dimension_numbers<[1], [0], [0], [1], [0, 0, 1, 1], [], []>} : vector<2x32xf32>, vector<32x96xf32>, vector<2x96xf32> -> vector<2x96xf32>
    %107 = vector.broadcast %2 : vector<1x96xf32> to vector<2x96xf32>
    %108 = arith.addf %106, %107 : vector<2x96xf32>
    %109 = vector.extract_strided_slice %105 {offsets = [0, 0], sizes = [2, 64], strides = [1, 1]} : vector<2x96xf32> to vector<2x64xf32>
    %110 = vector.extract_strided_slice %108 {offsets = [0, 0], sizes = [2, 64], strides = [1, 1]} : vector<2x96xf32> to vector<2x64xf32>
    %111 = arith.addf %109, %110 : vector<2x64xf32>
    %112 = arith.negf %111 : vector<2x64xf32>
    %113 = math.exp %112 : vector<2x64xf32>
    %cst_22 = arith.constant 1.000000e+00 : f32
    %114 = vector.broadcast %cst_22 : f32 to vector<2x64xf32>
    %115 = arith.addf %114, %113 : vector<2x64xf32>
    %116 = arith.divf %114, %115 : vector<2x64xf32>
    %117 = vector.extract_strided_slice %116 {offsets = [0, 0], sizes = [2, 32], strides = [1, 1]} : vector<2x64xf32> to vector<2x32xf32>
    %118 = vector.extract_strided_slice %116 {offsets = [0, 32], sizes = [2, 32], strides = [1, 1]} : vector<2x64xf32> to vector<2x32xf32>
    %119 = vector.extract_strided_slice %105 {offsets = [0, 64], sizes = [2, 32], strides = [1, 1]} : vector<2x96xf32> to vector<2x32xf32>
    %120 = vector.extract_strided_slice %108 {offsets = [0, 64], sizes = [2, 32], strides = [1, 1]} : vector<2x96xf32> to vector<2x32xf32>
    %121 = arith.mulf %117, %120 : vector<2x32xf32>
    %122 = arith.addf %119, %121 : vector<2x32xf32>
    %123 = math.tanh %122 : vector<2x32xf32>
    %cst_23 = arith.constant 1.000000e+00 : f32
    %124 = vector.broadcast %cst_23 : f32 to vector<2x32xf32>
    %125 = arith.subf %124, %118 : vector<2x32xf32>
    %126 = arith.mulf %125, %123 : vector<2x32xf32>
    %127 = arith.mulf %118, %104 : vector<2x32xf32>
    %128 = arith.addf %126, %127 : vector<2x32xf32>
    %129 = vector.extract_strided_slice %7 {offsets = [10, 0], sizes = [2, 96], strides = [1, 1]} : vector<16x96xf32> to vector<2x96xf32>
    %cst_24 = arith.constant dense<0.000000e+00> : vector<2x96xf32>
    %130 = tpu.matmul %128, %0, %cst_24 {dimension_numbers = #tpu.dot_dimension_numbers<[1], [0], [0], [1], [0, 0, 1, 1], [], []>} : vector<2x32xf32>, vector<32x96xf32>, vector<2x96xf32> -> vector<2x96xf32>
    %131 = vector.broadcast %2 : vector<1x96xf32> to vector<2x96xf32>
    %132 = arith.addf %130, %131 : vector<2x96xf32>
    %133 = vector.extract_strided_slice %129 {offsets = [0, 0], sizes = [2, 64], strides = [1, 1]} : vector<2x96xf32> to vector<2x64xf32>
    %134 = vector.extract_strided_slice %132 {offsets = [0, 0], sizes = [2, 64], strides = [1, 1]} : vector<2x96xf32> to vector<2x64xf32>
    %135 = arith.addf %133, %134 : vector<2x64xf32>
    %136 = arith.negf %135 : vector<2x64xf32>
    %137 = math.exp %136 : vector<2x64xf32>
    %cst_25 = arith.constant 1.000000e+00 : f32
    %138 = vector.broadcast %cst_25 : f32 to vector<2x64xf32>
    %139 = arith.addf %138, %137 : vector<2x64xf32>
    %140 = arith.divf %138, %139 : vector<2x64xf32>
    %141 = vector.extract_strided_slice %140 {offsets = [0, 0], sizes = [2, 32], strides = [1, 1]} : vector<2x64xf32> to vector<2x32xf32>
    %142 = vector.extract_strided_slice %140 {offsets = [0, 32], sizes = [2, 32], strides = [1, 1]} : vector<2x64xf32> to vector<2x32xf32>
    %143 = vector.extract_strided_slice %129 {offsets = [0, 64], sizes = [2, 32], strides = [1, 1]} : vector<2x96xf32> to vector<2x32xf32>
    %144 = vector.extract_strided_slice %132 {offsets = [0, 64], sizes = [2, 32], strides = [1, 1]} : vector<2x96xf32> to vector<2x32xf32>
    %145 = arith.mulf %141, %144 : vector<2x32xf32>
    %146 = arith.addf %143, %145 : vector<2x32xf32>
    %147 = math.tanh %146 : vector<2x32xf32>
    %cst_26 = arith.constant 1.000000e+00 : f32
    %148 = vector.broadcast %cst_26 : f32 to vector<2x32xf32>
    %149 = arith.subf %148, %142 : vector<2x32xf32>
    %150 = arith.mulf %149, %147 : vector<2x32xf32>
    %151 = arith.mulf %142, %128 : vector<2x32xf32>
    %152 = arith.addf %150, %151 : vector<2x32xf32>
    %153 = vector.extract_strided_slice %7 {offsets = [12, 0], sizes = [2, 96], strides = [1, 1]} : vector<16x96xf32> to vector<2x96xf32>
    %cst_27 = arith.constant dense<0.000000e+00> : vector<2x96xf32>
    %154 = tpu.matmul %152, %0, %cst_27 {dimension_numbers = #tpu.dot_dimension_numbers<[1], [0], [0], [1], [0, 0, 1, 1], [], []>} : vector<2x32xf32>, vector<32x96xf32>, vector<2x96xf32> -> vector<2x96xf32>
    %155 = vector.broadcast %2 : vector<1x96xf32> to vector<2x96xf32>
    %156 = arith.addf %154, %155 : vector<2x96xf32>
    %157 = vector.extract_strided_slice %153 {offsets = [0, 0], sizes = [2, 64], strides = [1, 1]} : vector<2x96xf32> to vector<2x64xf32>
    %158 = vector.extract_strided_slice %156 {offsets = [0, 0], sizes = [2, 64], strides = [1, 1]} : vector<2x96xf32> to vector<2x64xf32>
    %159 = arith.addf %157, %158 : vector<2x64xf32>
    %160 = arith.negf %159 : vector<2x64xf32>
    %161 = math.exp %160 : vector<2x64xf32>
    %cst_28 = arith.constant 1.000000e+00 : f32
    %162 = vector.broadcast %cst_28 : f32 to vector<2x64xf32>
    %163 = arith.addf %162, %161 : vector<2x64xf32>
    %164 = arith.divf %162, %163 : vector<2x64xf32>
    %165 = vector.extract_strided_slice %164 {offsets = [0, 0], sizes = [2, 32], strides = [1, 1]} : vector<2x64xf32> to vector<2x32xf32>
    %166 = vector.extract_strided_slice %164 {offsets = [0, 32], sizes = [2, 32], strides = [1, 1]} : vector<2x64xf32> to vector<2x32xf32>
    %167 = vector.extract_strided_slice %153 {offsets = [0, 64], sizes = [2, 32], strides = [1, 1]} : vector<2x96xf32> to vector<2x32xf32>
    %168 = vector.extract_strided_slice %156 {offsets = [0, 64], sizes = [2, 32], strides = [1, 1]} : vector<2x96xf32> to vector<2x32xf32>
    %169 = arith.mulf %165, %168 : vector<2x32xf32>
    %170 = arith.addf %167, %169 : vector<2x32xf32>
    %171 = math.tanh %170 : vector<2x32xf32>
    %cst_29 = arith.constant 1.000000e+00 : f32
    %172 = vector.broadcast %cst_29 : f32 to vector<2x32xf32>
    %173 = arith.subf %172, %166 : vector<2x32xf32>
    %174 = arith.mulf %173, %171 : vector<2x32xf32>
    %175 = arith.mulf %166, %152 : vector<2x32xf32>
    %176 = arith.addf %174, %175 : vector<2x32xf32>
    %177 = vector.extract_strided_slice %7 {offsets = [14, 0], sizes = [2, 96], strides = [1, 1]} : vector<16x96xf32> to vector<2x96xf32>
    %cst_30 = arith.constant dense<0.000000e+00> : vector<2x96xf32>
    %178 = tpu.matmul %176, %0, %cst_30 {dimension_numbers = #tpu.dot_dimension_numbers<[1], [0], [0], [1], [0, 0, 1, 1], [], []>} : vector<2x32xf32>, vector<32x96xf32>, vector<2x96xf32> -> vector<2x96xf32>
    %179 = vector.broadcast %2 : vector<1x96xf32> to vector<2x96xf32>
    %180 = arith.addf %178, %179 : vector<2x96xf32>
    %181 = vector.extract_strided_slice %177 {offsets = [0, 0], sizes = [2, 64], strides = [1, 1]} : vector<2x96xf32> to vector<2x64xf32>
    %182 = vector.extract_strided_slice %180 {offsets = [0, 0], sizes = [2, 64], strides = [1, 1]} : vector<2x96xf32> to vector<2x64xf32>
    %183 = arith.addf %181, %182 : vector<2x64xf32>
    %184 = arith.negf %183 : vector<2x64xf32>
    %185 = math.exp %184 : vector<2x64xf32>
    %cst_31 = arith.constant 1.000000e+00 : f32
    %186 = vector.broadcast %cst_31 : f32 to vector<2x64xf32>
    %187 = arith.addf %186, %185 : vector<2x64xf32>
    %188 = arith.divf %186, %187 : vector<2x64xf32>
    %189 = vector.extract_strided_slice %188 {offsets = [0, 0], sizes = [2, 32], strides = [1, 1]} : vector<2x64xf32> to vector<2x32xf32>
    %190 = vector.extract_strided_slice %188 {offsets = [0, 32], sizes = [2, 32], strides = [1, 1]} : vector<2x64xf32> to vector<2x32xf32>
    %191 = vector.extract_strided_slice %177 {offsets = [0, 64], sizes = [2, 32], strides = [1, 1]} : vector<2x96xf32> to vector<2x32xf32>
    %192 = vector.extract_strided_slice %180 {offsets = [0, 64], sizes = [2, 32], strides = [1, 1]} : vector<2x96xf32> to vector<2x32xf32>
    %193 = arith.mulf %189, %192 : vector<2x32xf32>
    %194 = arith.addf %191, %193 : vector<2x32xf32>
    %195 = math.tanh %194 : vector<2x32xf32>
    %cst_32 = arith.constant 1.000000e+00 : f32
    %196 = vector.broadcast %cst_32 : f32 to vector<2x32xf32>
    %197 = arith.subf %196, %190 : vector<2x32xf32>
    %198 = arith.mulf %197, %195 : vector<2x32xf32>
    %199 = arith.mulf %190, %176 : vector<2x32xf32>
    %200 = arith.addf %198, %199 : vector<2x32xf32>
    %201 = tpu.concatenate %32, %56, %80, %104, %128, %152, %176, %200 in 1 : vector<2x32xf32>, vector<2x32xf32>, vector<2x32xf32>, vector<2x32xf32>, vector<2x32xf32>, vector<2x32xf32>, vector<2x32xf32>, vector<2x32xf32> -> vector<2x256xf32>
    %c0_33 = arith.constant 0 : index
    %c0_34 = arith.constant 0 : index
    %202 = vector.load %arg5[%c0_33, %c0_34] : memref<2x256xf32, #tpu.memory_space<vmem>>, vector<2x256xf32>
    tpu.vector_store %arg5[%c0_33, %c0_34], %201 {strides = array<i32>} : memref<2x256xf32, #tpu.memory_space<vmem>>, vector<2x256xf32>,
    %c0_35 = arith.constant 0 : index
    %c0_36 = arith.constant 0 : index
    %c0_37 = arith.constant 0 : index
    %203 = vector.load %arg6[%c0_35, %c0_36, %c0_37] : memref<1x2x32xf32, #tpu.memory_space<vmem>>, vector<1x2x32xf32>
    %204 = vector.shape_cast %203 : vector<1x2x32xf32> to vector<2x32xf32>
    %205 = vector.shape_cast %200 : vector<2x32xf32> to vector<1x2x32xf32>
    tpu.vector_store %arg6[%c0_35, %c0_36, %c0_37], %205 {strides = array<i32>} : memref<1x2x32xf32, #tpu.memory_space<vmem>>, vector<1x2x32xf32>,
    return
  }
  func.func @transform_0(%arg0: i32) -> (i32, i32) {
    %c0_i32 = arith.constant 0 : i32
    %c0_i32_0 = arith.constant 0 : i32
    %c0_i32_1 = arith.constant 0 : i32
    return %c0_i32, %c0_i32_0 : i32, i32
  }
  func.func @transform_1(%arg0: i32) -> (i32, i32) {
    %c0_i32 = arith.constant 0 : i32
    %c0_i32_0 = arith.constant 0 : i32
    %c0_i32_1 = arith.constant 0 : i32
    return %c0_i32, %c0_i32_0 : i32, i32
  }
  func.func @transform_2(%arg0: i32) -> (i32, i32) {
    %c0_i32 = arith.constant 0 : i32
    %c0_i32_0 = arith.constant 0 : i32
    %c0_i32_1 = arith.constant 0 : i32
    return %c0_i32, %c0_i32_0 : i32, i32
  }
  func.func @transform_3(%arg0: i32) -> (i32, i32) {
    %c0_i32 = arith.constant 0 : i32
    %c0_i32_0 = arith.constant 0 : i32
    %c0_i32_1 = arith.constant 0 : i32
    return %c0_i32, %c0_i32_0 : i32, i32
  }
  func.func @transform_4(%arg0: i32) -> (i32, i32) {
    %c0_i32 = arith.constant 0 : i32
    %c0_i32_0 = arith.constant 0 : i32
    %c0_i32_1 = arith.constant 0 : i32
    return %c0_i32, %c0_i32_0 : i32, i32
  }
  func.func @transform_5(%arg0: i32) -> (i32, i32, i32) {
    %c0_i32 = arith.constant 0 : i32
    %c0_i32_0 = arith.constant 0 : i32
    %c0_i32_1 = arith.constant 0 : i32
    %c0_i32_2 = arith.constant 0 : i32
    return %c0_i32, %c0_i32_0, %c0_i32_1 : i32, i32, i32
  }
}

</mosaic_0001>

<llo_original>
// kernel: eq.1
$region0: #{eq.1}
  %s0 = inlined_call_operand.vmem [shape: s32[8,2], index: 0, kind: input, shape index: {}]
  %s1 = inlined_call_operand.vmem [shape: s32[16], index: 1, kind: output, shape index: {}]
  $region1: #{eq.1} parent=0
    #allocation0 [shape = 'u8[4096]{0}', space=vmem, size = 0x1000, scoped, tag = 'scoped mem for output reshape']
    %v2 = vld [vmem:[%s0] sm:$0x1]
    %vm3 = vcmask 15360
    %4 = vst.msk [vmem:[#allocation0] sm:$0x1] %vm3, %v2
    %s5 = scalar_lea.vmem %s0, 7
    %v6 = vld [vmem:[%s5] sm:$0x1]
    %7 = vrot.lane.b32.xlu0 %v6, 14
    %v8 = vpop.permute.xlu0 %7
    %vm9 = vcmask 130160
    %10 = vst.msk [vmem:[#allocation0] sm:$0x1] %vm9, %v8
    %s11 = scalar_lea.vmem %s0, 6
    %v12 = vld [vmem:[%s11] sm:$0x1]
    %13 = vrot.lane.b32.xlu0 %v12, 12
    %v14 = vpop.permute.xlu0 %13
    %vm15 = vcmask 113760
    %16 = vst.msk [vmem:[#allocation0] sm:$0x1] %vm15, %v14
    %s17 = scalar_lea.vmem %s0, 5
    %v18 = vld [vmem:[%s17] sm:$0x1]
    %19 = vrot.lane.b32.xlu0 %v18, 10
    %v20 = vpop.permute.xlu0 %19
    %vm21 = vcmask 97360
    %22 = vst.msk [vmem:[#allocation0] sm:$0x1] %vm21, %v20
    %s23 = scalar_lea.vmem %s0, 4
    %v24 = vld [vmem:[%s23] sm:$0x1]
    %25 = vrot.lane.b32.xlu0 %v24, 8
    %v26 = vpop.permute.xlu0 %25
    %vm27 = vcmask 80960
    %28 = vst.msk [vmem:[#allocation0] sm:$0x1] %vm27, %v26
    %s29 = scalar_lea.vmem %s0, 3
    %v30 = vld [vmem:[%s29] sm:$0x1]
    %31 = vrot.lane.b32.xlu0 %v30, 6
    %v32 = vpop.permute.xlu0 %31
    %vm33 = vcmask 64560
    %34 = vst.msk [vmem:[#allocation0] sm:$0x1] %vm33, %v32
    %s35 = scalar_lea.vmem %s0, 2
    %v36 = vld [vmem:[%s35] sm:$0x1]
    %37 = vrot.lane.b32.xlu0 %v36, 4
    %v38 = vpop.permute.xlu0 %37
    %vm39 = vcmask 48160
    %40 = vst.msk [vmem:[#allocation0] sm:$0x1] %vm39, %v38
    %s41 = scalar_lea.vmem %s0, 1
    %v42 = vld [vmem:[%s41] sm:$0x1]
    %43 = vrot.lane.b32.xlu0 %v42, 2
    %v44 = vpop.permute.xlu0 %43
    %vm45 = vcmask 31760
    %46 = vst.msk [vmem:[#allocation0] sm:$0x1] %vm45, %v44
    %s48 = ssub.s32 2, 1
    %v49 = vld [vmem:[#allocation0] sm:%s48]
    %s51 = ssub.s32 2, 1
    %52 = vst [vmem:[%s1] sm:%s51] %v49

// kernel: _encoder_forward.1
$region0: #{_encoder_forward.1}
  #allocation0 [shape = 'u32[]', space=smem, size = 0x4, offset = 0x4, fixed_abs, tag = 'smem constant byte address 0x4 - core index']
  #allocation1 [shape = 'u32[72,128]{1,0:T(1,128)}', space=vmem, size = 0x9000, scoped, tag = 'internal scratch']
  %s0 = inlined_call_operand.vmem [shape: f32[16,16], index: 0, kind: input, shape index: {}]
  %s1 = inlined_call_operand.hbm [shape: f32[16,96], index: 1, kind: input, shape index: {}]
  %s2 = inlined_call_operand.vmem [shape: f32[32,96], index: 2, kind: input, shape index: {}]
  %s3 = inlined_call_operand.vmem [shape: f32[2,96], index: 3, kind: input, shape index: {}]
  %s4 = inlined_call_operand.vmem [shape: f32[2,256], index: 4, kind: output, shape index: {0}]
  %s5 = inlined_call_operand.hbm [shape: f32[1,2,32], index: 5, kind: output, shape index: {1}]
  %6 = xla_tuple %s4, %s5
  %s7 = sld [smem:[#allocation0]]
  $region38: #{_encoder_forward.1} parent=0
    _
  %s9 = ssub.s32 1, %s7
  %s10 = scalar_select 0, %s9, %s7
  $region1: #{_encoder_forward.1} parent=0
    #allocation2 [shape = 'u8[8192]{0}', space=vmem, size = 0x2000, scoped, tag = 'input window, operand 1, single buffered']
    #allocation3 [shape = 's32[1]{0}', space=sflag, size = 0x4, scoped, tag = 'scoped memory for _encoder_forward.1']
    #allocation4 [shape = 's32[1]{0}', space=sflag, size = 0x4, scoped, tag = 'scoped memory for _encoder_forward.1']
    #allocation5 [shape = 'u8[1024]{0}', space=vmem, size = 0x400, scoped, tag = 'output window, operand 1, single buffered']
    %11 = vsyncpa [#allocation3], 0
    %12 = vsyncpa [#allocation4], 0
    // Predicated region
    $region2: #{_encoder_forward.1} parent=1 // pred_check
      _
    $region3: #{_encoder_forward.1} parent=1 // pred_check_branch
      %14 = sbr.rel (0) target = $region5
    $region4: #{_encoder_forward.1} parent=1 // pred_region
      _
    $region5: #{_encoder_forward.1} parent=1 // pred_fallthru
      _
    // Predicated region
    $region6: #{_encoder_forward.1} parent=1 // pred_check
      _
    $region7: #{_encoder_forward.1} parent=1 // pred_check_branch
      %16 = sbr.rel (0) target = $region9
    $region8: #{_encoder_forward.1} parent=1 // pred_region
      %18 = vsyncadd [#allocation3], 0
      %s19 = sshll.u32 %s1, 4
      %s20 = int_to_ptr.hbm [resolvable:$true] %s19
      %s21 = sshll.u32 [#allocation2], 4
      %s22 = int_to_ptr.vmem [resolvable:$true] %s21
      %27 = dma.hbm_to_vmem [thread:$0]  %s20, 256, %s22, [#allocation3], 128, 128, 8
    $region9: #{_encoder_forward.1} parent=1 // pred_fallthru
      _
    // Predicated region
    $region10: #{_encoder_forward.1} parent=1 // pred_check
      _
    $region11: #{_encoder_forward.1} parent=1 // pred_check_branch
      %29 = sbr.rel (0) target = $region13
    $region12: #{_encoder_forward.1} parent=1 // pred_region
      _
    $region13: #{_encoder_forward.1} parent=1 // pred_fallthru
      _
    // Predicated region
    $region14: #{_encoder_forward.1} parent=1 // pred_check
      _
    $region15: #{_encoder_forward.1} parent=1 // pred_check_branch
      %31 = sbr.rel (0) target = $region17
    $region16: #{_encoder_forward.1} parent=1 // pred_region
      _
    $region17: #{_encoder_forward.1} parent=1 // pred_fallthru
      _
    // Predicated region
    $region18: #{_encoder_forward.1} parent=1 // pred_check
      _
    $region19: #{_encoder_forward.1} parent=1 // pred_check_branch
      %33 = sbr.rel (0) target = $region21
    $region20: #{_encoder_forward.1} parent=1 // pred_region
      %35 = dma.done [#allocation3], 256
    $region21: #{_encoder_forward.1} parent=1 // pred_fallthru
      _
    %v36 = vld [vmem:[%s2] sm:$0xff]
    %v37 = vld [vmem:[%s2 + $0x8] sm:$0xff]
    %v38 = vld [vmem:[%s2 + $0x10] sm:$0xff]
    %v39 = vld [vmem:[%s2 + $0x18] sm:$0xff]
    %v40 = vld [vmem:[%s3] sm:$0x1]
    %v41 = vld [vmem:[%s3 + $0x1] sm:$0x1]
    %v42 = vld [vmem:[%s0] sm:$0xff]
    %v43 = vld [vmem:[%s0 + $0x8] sm:$0xff]
    %v44 = vld [vmem:[#allocation2] sm:$0xff]
    %v45 = vld [vmem:[#allocation2 + $0x8] sm:$0xff]
    %v46 = vperm.slane %v40, 0
    %vm47 = vcmask 130048
    %v49 = vsel %vm47, %v42, 0
    %v52 = vsel %vm47, %v43, 0
    %54 = vmatpush.msra.mxu0 0.0
    %55 = vmatpush.msra.mxu0 0.0
    %56 = vmatpush.msra.mxu0 0.0
    %57 = vmatpush.msra.mxu0 0.0
    %58 = vmatpush.msra.mxu0 0.0
    %59 = vmatpush.msra.mxu0 0.0
    %60 = vmatpush.msra.mxu0 0.0
    %61 = vmatpush.msra.mxu0 0.0
    %62 = vmatpush.msra.mxu0 0.0
    %63 = vmatpush.msra.mxu0 0.0
    %64 = vmatpush.msra.mxu0 0.0
    %65 = vmatpush.msra.mxu0 0.0
    %66 = vmatpush.msra.mxu0 0.0
    %67 = vmatpush.msra.mxu0 0.0
    %68 = vmatpush.msra.mxu0 %v45
    %69 = vmatpush.msra.mxu0 %v44
    %70 = vmatmul.f32.gmra.mxu0 %v49
    %v71 = vpop.f32.mrf.mxu0
    %v72 = vadd.f32 %v46, %v71
    %73 = vmatmul.f32.gmra.mxu0 %v52
    %v74 = vpop.f32.mrf.mxu0
    %v75 = vadd.f32 %v46, %v74
    %76 = vdwg.mxu0
    %v77 = vperm.slane %v41, 0
    %vm78 = vcmask 261120
    %v80 = vsel %vm78, 0.0, 0
    %82 = vmatpush.msra.mxu0 0.0
    %83 = vmatpush.msra.mxu0 0.0
    %84 = vmatpush.msra.mxu0 0.0
    %85 = vmatpush.msra.mxu0 0.0
    %86 = vmatpush.msra.mxu0 0.0
    %87 = vmatpush.msra.mxu0 0.0
    %88 = vmatpush.msra.mxu0 0.0
    %89 = vmatpush.msra.mxu0 0.0
    %90 = vmatpush.msra.mxu0 0.0
    %91 = vmatpush.msra.mxu0 0.0
    %92 = vmatpush.msra.mxu0 0.0
    %93 = vmatpush.msra.mxu0 0.0
    %94 = vmatpush.msra.mxu0 %v39
    %95 = vmatpush.msra.mxu0 %v38
    %96 = vmatpush.msra.mxu0 %v37
    %97 = vmatpush.msra.mxu0 %v36
    %98 = vmatmul.f32.gmra.mxu0 %v80
    %v99 = vpop.f32.mrf.mxu0
    %v100 = vadd.f32 %v77, %v99
    %101 = vdwg.mxu0
    %v102 = vadd.f32 %v72, %v100
    %v103 = vxor.u32 %v102, 2147483648
    %v104 = vmul.f32 %v103, 1.442695
    %v105 = vpow.pop %v104
    %v106 = vadd.f32 %v105, 1.0
    %v107 = vrcp.pop %v106
    %v108 = vmul.f32 %v106, %v107
    %v109 = vsub.f32 1.0, %v108
    %v110 = vmul.f32 %v107, %v109
    %v111 = vadd.f32 %v107, %v110
    %vm112 = vweird.f32 %v106
    %vm113 = vweird.f32 %v107
    %vm114 = vmor %vm112, %vm113
    %v115 = vsel %vm114, %v107, %v111
    %v116 = vand.u32 2147483647, %v106
    %vm117 = vcmp.eq.f32.partialorder %v116, 8.507059e+37
    %v118 = vand.u32 %v106, 2147483648
    %v119 = vor.u32 1.1754944e-38, %v118
    %v120 = vsel %vm117, %v119, %v115
    %v121 = vmul.f32 1.0, %v120
    %123 = vrot.lane.b32.xlu0 %v100, 64
    %v124 = vpop.permute.xlu0 %123
    %v126 = vmul.f32 %v121, %v124
    %128 = vrot.lane.b32.xlu0 %v126, 64
    %v129 = vpop.permute.xlu0 %128
    %v131 = vadd.f32 %v72, %v129
    %v132 = vtanh.pop %v131
    %v133 = vsub.f32 1.0, %v121
    %135 = vrot.lane.b32.xlu0 %v132, 96
    %v136 = vpop.permute.xlu0 %135
    %v138 = vmul.f32 %v133, %v136
    %v139 = vmul.f32 %v121, 0.0
    %v140 = vadd.f32 %v138, %v139
    %142 = vrot.lane.b32.xlu0 %v140, 96
    %v143 = vpop.permute.xlu0 %142
    %v144 = vsel %vm78, %v143, 0
    %146 = vmatpush.msra.mxu0 0.0
    %147 = vmatpush.msra.mxu0 0.0
    %148 = vmatpush.msra.mxu0 0.0
    %149 = vmatpush.msra.mxu0 0.0
    %150 = vmatpush.msra.mxu0 0.0
    %151 = vmatpush.msra.mxu0 0.0
    %152 = vmatpush.msra.mxu0 0.0
    %153 = vmatpush.msra.mxu0 0.0
    %154 = vmatpush.msra.mxu0 0.0
    %155 = vmatpush.msra.mxu0 0.0
    %156 = vmatpush.msra.mxu0 0.0
    %157 = vmatpush.msra.mxu0 0.0
    %158 = vmatpush.msra.mxu0 %v39
    %159 = vmatpush.msra.mxu0 %v38
    %160 = vmatpush.msra.mxu0 %v37
    %161 = vmatpush.msra.mxu0 %v36
    %162 = vmatmul.f32.gmra.mxu0 %v144
    %v163 = vpop.f32.mrf.mxu0
    %v164 = vadd.f32 %v77, %v163
    %165 = vdwg.mxu0
    %v167 = vrot.slane %v164, 6
    %v169 = vadd.f32 %v72, %v167
    %v170 = vxor.u32 %v169, 2147483648
    %v171 = vmul.f32 %v170, 1.442695
    %v172 = vpow.pop %v171
    %v173 = vadd.f32 %v172, 1.0
    %v174 = vrcp.pop %v173
    %v175 = vmul.f32 %v173, %v174
    %v176 = vsub.f32 1.0, %v175
    %v177 = vmul.f32 %v174, %v176
    %v178 = vadd.f32 %v174, %v177
    %vm179 = vweird.f32 %v173
    %vm180 = vweird.f32 %v174
    %vm181 = vmor %vm179, %vm180
    %v182 = vsel %vm181, %v174, %v178
    %v183 = vand.u32 2147483647, %v173
    %vm184 = vcmp.eq.f32.partialorder %v183, 8.507059e+37
    %v185 = vand.u32 %v173, 2147483648
    %v186 = vor.u32 1.1754944e-38, %v185
    %v187 = vsel %vm184, %v186, %v182
    %v188 = vmul.f32 1.0, %v187
    %189 = vrot.lane.b32.xlu0 %v167, 64
    %v190 = vpop.permute.xlu0 %189
    %v192 = vmul.f32 %v188, %v190
    %194 = vrot.lane.b32.xlu0 %v192, 64
    %v195 = vpop.permute.xlu0 %194
    %v197 = vadd.f32 %v72, %v195
    %v198 = vtanh.pop %v197
    %v199 = vsub.f32 1.0, %v188
    %201 = vrot.lane.b32.xlu0 %v198, 96
    %v202 = vpop.permute.xlu0 %201
    %v204 = vmul.f32 %v199, %v202
    %v205 = vrot.slane %v140, 6
    %v207 = vmul.f32 %v188, %v205
    %v208 = vadd.f32 %v204, %v207
    %v210 = vrot.slane %v208, 2
    %211 = vrot.lane.b32.xlu0 %v210, 96
    %v212 = vpop.permute.xlu0 %211
    %v213 = vsel %vm78, %v212, 0
    %215 = vmatpush.msra.mxu0 0.0
    %216 = vmatpush.msra.mxu0 0.0
    %217 = vmatpush.msra.mxu0 0.0
    %218 = vmatpush.msra.mxu0 0.0
    %219 = vmatpush.msra.mxu0 0.0
    %220 = vmatpush.msra.mxu0 0.0
    %221 = vmatpush.msra.mxu0 0.0
    %222 = vmatpush.msra.mxu0 0.0
    %223 = vmatpush.msra.mxu0 0.0
    %224 = vmatpush.msra.mxu0 0.0
    %225 = vmatpush.msra.mxu0 0.0
    %226 = vmatpush.msra.mxu0 0.0
    %227 = vmatpush.msra.mxu0 %v39
    %228 = vmatpush.msra.mxu0 %v38
    %229 = vmatpush.msra.mxu0 %v37
    %230 = vmatpush.msra.mxu0 %v36
    %231 = vmatmul.f32.gmra.mxu0 %v213
    %v232 = vpop.f32.mrf.mxu0
    %v233 = vadd.f32 %v77, %v232
    %234 = vdwg.mxu0
    %v236 = vrot.slane %v233, 4
    %v238 = vadd.f32 %v72, %v236
    %v239 = vxor.u32 %v238, 2147483648
    %v240 = vmul.f32 %v239, 1.442695
    %v241 = vpow.pop %v240
    %v242 = vadd.f32 %v241, 1.0
    %v243 = vrcp.pop %v242
    %v244 = vmul.f32 %v242, %v243
    %v245 = vsub.f32 1.0, %v244
    %v246 = vmul.f32 %v243, %v245
    %v247 = vadd.f32 %v243, %v246
    %vm248 = vweird.f32 %v242
    %vm249 = vweird.f32 %v243
    %vm250 = vmor %vm248, %vm249
    %v251 = vsel %vm250, %v243, %v247
    %v252 = vand.u32 2147483647, %v242
    %vm253 = vcmp.eq.f32.partialorder %v252, 8.507059e+37
    %v254 = vand.u32 %v242, 2147483648
    %v255 = vor.u32 1.1754944e-38, %v254
    %v256 = vsel %vm253, %v255, %v251
    %v257 = vmul.f32 1.0, %v256
    %258 = vrot.lane.b32.xlu0 %v236, 64
    %v259 = vpop.permute.xlu0 %258
    %v261 = vmul.f32 %v257, %v259
    %263 = vrot.lane.b32.xlu0 %v261, 64
    %v264 = vpop.permute.xlu0 %263
    %v266 = vadd.f32 %v72, %v264
    %v267 = vtanh.pop %v266
    %v268 = vsub.f32 1.0, %v257
    %270 = vrot.lane.b32.xlu0 %v267, 96
    %v271 = vpop.permute.xlu0 %270
    %v273 = vmul.f32 %v268, %v271
    %v274 = vrot.slane %v208, 6
    %v276 = vmul.f32 %v257, %v274
    %v277 = vadd.f32 %v273, %v276
    %v279 = vrot.slane %v277, 4
    %280 = vrot.lane.b32.xlu0 %v279, 96
    %v281 = vpop.permute.xlu0 %280
    %v282 = vsel %vm78, %v281, 0
    %284 = vmatpush.msra.mxu0 0.0
    %285 = vmatpush.msra.mxu0 0.0
    %286 = vmatpush.msra.mxu0 0.0
    %287 = vmatpush.msra.mxu0 0.0
    %288 = vmatpush.msra.mxu0 0.0
    %289 = vmatpush.msra.mxu0 0.0
    %290 = vmatpush.msra.mxu0 0.0
    %291 = vmatpush.msra.mxu0 0.0
    %292 = vmatpush.msra.mxu0 0.0
    %293 = vmatpush.msra.mxu0 0.0
    %294 = vmatpush.msra.mxu0 0.0
    %295 = vmatpush.msra.mxu0 0.0
    %296 = vmatpush.msra.mxu0 %v39
    %297 = vmatpush.msra.mxu0 %v38
    %298 = vmatpush.msra.mxu0 %v37
    %299 = vmatpush.msra.mxu0 %v36
    %300 = vmatmul.f32.gmra.mxu0 %v282
    %v301 = vpop.f32.mrf.mxu0
    %v302 = vadd.f32 %v77, %v301
    %303 = vdwg.mxu0
    %v305 = vrot.slane %v302, 2
    %v307 = vadd.f32 %v72, %v305
    %v308 = vxor.u32 %v307, 2147483648
    %v309 = vmul.f32 %v308, 1.442695
    %v310 = vpow.pop %v309
    %v311 = vadd.f32 %v310, 1.0
    %v312 = vrcp.pop %v311
    %v313 = vmul.f32 %v311, %v312
    %v314 = vsub.f32 1.0, %v313
    %v315 = vmul.f32 %v312, %v314
    %v316 = vadd.f32 %v312, %v315
    %vm317 = vweird.f32 %v311
    %vm318 = vweird.f32 %v312
    %vm319 = vmor %vm317, %vm318
    %v320 = vsel %vm319, %v312, %v316
    %v321 = vand.u32 2147483647, %v311
    %vm322 = vcmp.eq.f32.partialorder %v321, 8.507059e+37
    %v323 = vand.u32 %v311, 2147483648
    %v324 = vor.u32 1.1754944e-38, %v323
    %v325 = vsel %vm322, %v324, %v320
    %v326 = vmul.f32 1.0, %v325
    %327 = vrot.lane.b32.xlu0 %v305, 64
    %v328 = vpop.permute.xlu0 %327
    %v330 = vmul.f32 %v326, %v328
    %332 = vrot.lane.b32.xlu0 %v330, 64
    %v333 = vpop.permute.xlu0 %332
    %v335 = vadd.f32 %v72, %v333
    %v336 = vtanh.pop %v335
    %v337 = vsub.f32 1.0, %v326
    %339 = vrot.lane.b32.xlu0 %v336, 96
    %v340 = vpop.permute.xlu0 %339
    %v342 = vmul.f32 %v337, %v340
    %v343 = vrot.slane %v277, 6
    %v345 = vmul.f32 %v326, %v343
    %v346 = vadd.f32 %v342, %v345
    %v348 = vrot.slane %v346, 6
    %349 = vrot.lane.b32.xlu0 %v348, 96
    %v350 = vpop.permute.xlu0 %349
    %v351 = vsel %vm78, %v350, 0
    %353 = vmatpush.msra.mxu0 0.0
    %354 = vmatpush.msra.mxu0 0.0
    %355 = vmatpush.msra.mxu0 0.0
    %356 = vmatpush.msra.mxu0 0.0
    %357 = vmatpush.msra.mxu0 0.0
    %358 = vmatpush.msra.mxu0 0.0
    %359 = vmatpush.msra.mxu0 0.0
    %360 = vmatpush.msra.mxu0 0.0
    %361 = vmatpush.msra.mxu0 0.0
    %362 = vmatpush.msra.mxu0 0.0
    %363 = vmatpush.msra.mxu0 0.0
    %364 = vmatpush.msra.mxu0 0.0
    %365 = vmatpush.msra.mxu0 %v39
    %366 = vmatpush.msra.mxu0 %v38
    %367 = vmatpush.msra.mxu0 %v37
    %368 = vmatpush.msra.mxu0 %v36
    %369 = vmatmul.f32.gmra.mxu0 %v351
    %v370 = vpop.f32.mrf.mxu0
    %v371 = vadd.f32 %v77, %v370
    %372 = vdwg.mxu0
    %v373 = vadd.f32 %v75, %v371
    %v374 = vxor.u32 %v373, 2147483648
    %v375 = vmul.f32 %v374, 1.442695
    %v376 = vpow.pop %v375
    %v377 = vadd.f32 %v376, 1.0
    %v378 = vrcp.pop %v377
    %v379 = vmul.f32 %v377, %v378
    %v380 = vsub.f32 1.0, %v379
    %v381 = vmul.f32 %v378, %v380
    %v382 = vadd.f32 %v378, %v381
    %vm383 = vweird.f32 %v377
    %vm384 = vweird.f32 %v378
    %vm385 = vmor %vm383, %vm384
    %v386 = vsel %vm385, %v378, %v382
    %v387 = vand.u32 2147483647, %v377
    %vm388 = vcmp.eq.f32.partialorder %v387, 8.507059e+37
    %v389 = vand.u32 %v377, 2147483648
    %v390 = vor.u32 1.1754944e-38, %v389
    %v391 = vsel %vm388, %v390, %v386
    %v392 = vmul.f32 1.0, %v391
    %394 = vrot.lane.b32.xlu0 %v371, 64
    %v395 = vpop.permute.xlu0 %394
    %v397 = vmul.f32 %v392, %v395
    %399 = vrot.lane.b32.xlu0 %v397, 64
    %v400 = vpop.permute.xlu0 %399
    %v402 = vadd.f32 %v75, %v400
    %v403 = vtanh.pop %v402
    %v404 = vsub.f32 1.0, %v392
    %406 = vrot.lane.b32.xlu0 %v403, 96
    %v407 = vpop.permute.xlu0 %406
    %v409 = vmul.f32 %v404, %v407
    %v411 = vmul.f32 %v392, %v348
    %v412 = vadd.f32 %v409, %v411
    %414 = vrot.lane.b32.xlu0 %v412, 96
    %v415 = vpop.permute.xlu0 %414
    %v416 = vsel %vm78, %v415, 0
    %418 = vmatpush.msra.mxu0 0.0
    %419 = vmatpush.msra.mxu0 0.0
    %420 = vmatpush.msra.mxu0 0.0
    %421 = vmatpush.msra.mxu0 0.0
    %422 = vmatpush.msra.mxu0 0.0
    %423 = vmatpush.msra.mxu0 0.0
    %424 = vmatpush.msra.mxu0 0.0
    %425 = vmatpush.msra.mxu0 0.0
    %426 = vmatpush.msra.mxu0 0.0
    %427 = vmatpush.msra.mxu0 0.0
    %428 = vmatpush.msra.mxu0 0.0
    %429 = vmatpush.msra.mxu0 0.0
    %430 = vmatpush.msra.mxu0 %v39
    %431 = vmatpush.msra.mxu0 %v38
    %432 = vmatpush.msra.mxu0 %v37
    %433 = vmatpush.msra.mxu0 %v36
    %434 = vmatmul.f32.gmra.mxu0 %v416
    %v435 = vpop.f32.mrf.mxu0
    %v436 = vadd.f32 %v77, %v435
    %437 = vdwg.mxu0
    %v439 = vrot.slane %v436, 6
    %v441 = vadd.f32 %v75, %v439
    %v442 = vxor.u32 %v441, 2147483648
    %v443 = vmul.f32 %v442, 1.442695
    %v444 = vpow.pop %v443
    %v445 = vadd.f32 %v444, 1.0
    %v446 = vrcp.pop %v445
    %v447 = vmul.f32 %v445, %v446
    %v448 = vsub.f32 1.0, %v447
    %v449 = vmul.f32 %v446, %v448
    %v450 = vadd.f32 %v446, %v449
    %vm451 = vweird.f32 %v445
    %vm452 = vweird.f32 %v446
    %vm453 = vmor %vm451, %vm452
    %v454 = vsel %vm453, %v446, %v450
    %v455 = vand.u32 2147483647, %v445
    %vm456 = vcmp.eq.f32.partialorder %v455, 8.507059e+37
    %v457 = vand.u32 %v445, 2147483648
    %v458 = vor.u32 1.1754944e-38, %v457
    %v459 = vsel %vm456, %v458, %v454
    %v460 = vmul.f32 1.0, %v459
    %461 = vrot.lane.b32.xlu0 %v439, 64
    %v462 = vpop.permute.xlu0 %461
    %v464 = vmul.f32 %v460, %v462
    %466 = vrot.lane.b32.xlu0 %v464, 64
    %v467 = vpop.permute.xlu0 %466
    %v469 = vadd.f32 %v75, %v467
    %v470 = vtanh.pop %v469
    %v471 = vsub.f32 1.0, %v460
    %473 = vrot.lane.b32.xlu0 %v470, 96
    %v474 = vpop.permute.xlu0 %473
    %v476 = vmul.f32 %v471, %v474
    %v477 = vrot.slane %v412, 6
    %v479 = vmul.f32 %v460, %v477
    %v480 = vadd.f32 %v476, %v479
    %v482 = vrot.slane %v480, 2
    %483 = vrot.lane.b32.xlu0 %v482, 96
    %v484 = vpop.permute.xlu0 %483
    %v485 = vsel %vm78, %v484, 0
    %487 = vmatpush.msra.mxu0 0.0
    %488 = vmatpush.msra.mxu0 0.0
    %489 = vmatpush.msra.mxu0 0.0
    %490 = vmatpush.msra.mxu0 0.0
    %491 = vmatpush.msra.mxu0 0.0
    %492 = vmatpush.msra.mxu0 0.0
    %493 = vmatpush.msra.mxu0 0.0
    %494 = vmatpush.msra.mxu0 0.0
    %495 = vmatpush.msra.mxu0 0.0
    %496 = vmatpush.msra.mxu0 0.0
    %497 = vmatpush.msra.mxu0 0.0
    %498 = vmatpush.msra.mxu0 0.0
    %499 = vmatpush.msra.mxu0 %v39
    %500 = vmatpush.msra.mxu0 %v38
    %501 = vmatpush.msra.mxu0 %v37
    %502 = vmatpush.msra.mxu0 %v36
    %503 = vmatmul.f32.gmra.mxu0 %v485
    %v504 = vpop.f32.mrf.mxu0
    %v505 = vadd.f32 %v77, %v504
    %506 = vdwg.mxu0
    %v508 = vrot.slane %v505, 4
    %v510 = vadd.f32 %v75, %v508
    %v511 = vxor.u32 %v510, 2147483648
    %v512 = vmul.f32 %v511, 1.442695
    %v513 = vpow.pop %v512
    %v514 = vadd.f32 %v513, 1.0
    %v515 = vrcp.pop %v514
    %v516 = vmul.f32 %v514, %v515
    %v517 = vsub.f32 1.0, %v516
    %v518 = vmul.f32 %v515, %v517
    %v519 = vadd.f32 %v515, %v518
    %vm520 = vweird.f32 %v514
    %vm521 = vweird.f32 %v515
    %vm522 = vmor %vm520, %vm521
    %v523 = vsel %vm522, %v515, %v519
    %v524 = vand.u32 2147483647, %v514
    %vm525 = vcmp.eq.f32.partialorder %v524, 8.507059e+37
    %v526 = vand.u32 %v514, 2147483648
    %v527 = vor.u32 1.1754944e-38, %v526
    %v528 = vsel %vm525, %v527, %v523
    %v529 = vmul.f32 1.0, %v528
    %530 = vrot.lane.b32.xlu0 %v508, 64
    %v531 = vpop.permute.xlu0 %530
    %v533 = vmul.f32 %v529, %v531
    %535 = vrot.lane.b32.xlu0 %v533, 64
    %v536 = vpop.permute.xlu0 %535
    %v538 = vadd.f32 %v75, %v536
    %v539 = vtanh.pop %v538
    %v540 = vsub.f32 1.0, %v529
    %542 = vrot.lane.b32.xlu0 %v539, 96
    %v543 = vpop.permute.xlu0 %542
    %v545 = vmul.f32 %v540, %v543
    %v546 = vrot.slane %v480, 6
    %v548 = vmul.f32 %v529, %v546
    %v549 = vadd.f32 %v545, %v548
    %v551 = vrot.slane %v549, 4
    %552 = vrot.lane.b32.xlu0 %v551, 96
    %v553 = vpop.permute.xlu0 %552
    %v554 = vsel %vm78, %v553, 0
    %556 = vmatpush.msra.mxu0 0.0
    %557 = vmatpush.msra.mxu0 0.0
    %558 = vmatpush.msra.mxu0 0.0
    %559 = vmatpush.msra.mxu0 0.0
    %560 = vmatpush.msra.mxu0 0.0
    %561 = vmatpush.msra.mxu0 0.0
    %562 = vmatpush.msra.mxu0 0.0
    %563 = vmatpush.msra.mxu0 0.0
    %564 = vmatpush.msra.mxu0 0.0
    %565 = vmatpush.msra.mxu0 0.0
    %566 = vmatpush.msra.mxu0 0.0
    %567 = vmatpush.msra.mxu0 0.0
    %568 = vmatpush.msra.mxu0 %v39
    %569 = vmatpush.msra.mxu0 %v38
    %570 = vmatpush.msra.mxu0 %v37
    %571 = vmatpush.msra.mxu0 %v36
    %572 = vmatmul.f32.gmra.mxu0 %v554
    %v573 = vpop.f32.mrf.mxu0
    %v574 = vadd.f32 %v77, %v573
    %575 = vdwg.mxu0
    %v577 = vrot.slane %v574, 2
    %v579 = vadd.f32 %v75, %v577
    %v580 = vxor.u32 %v579, 2147483648
    %v581 = vmul.f32 %v580, 1.442695
    %v582 = vpow.pop %v581
    %v583 = vadd.f32 %v582, 1.0
    %v584 = vrcp.pop %v583
    %v585 = vmul.f32 %v583, %v584
    %v586 = vsub.f32 1.0, %v585
    %v587 = vmul.f32 %v584, %v586
    %v588 = vadd.f32 %v584, %v587
    %vm589 = vweird.f32 %v583
    %vm590 = vweird.f32 %v584
    %vm591 = vmor %vm589, %vm590
    %v592 = vsel %vm591, %v584, %v588
    %v593 = vand.u32 2147483647, %v583
    %vm594 = vcmp.eq.f32.partialorder %v593, 8.507059e+37
    %v595 = vand.u32 %v583, 2147483648
    %v596 = vor.u32 1.1754944e-38, %v595
    %v597 = vsel %vm594, %v596, %v592
    %v598 = vmul.f32 1.0, %v597
    %599 = vrot.lane.b32.xlu0 %v577, 64
    %v600 = vpop.permute.xlu0 %599
    %v602 = vmul.f32 %v598, %v600
    %604 = vrot.lane.b32.xlu0 %v602, 64
    %v605 = vpop.permute.xlu0 %604
    %v607 = vadd.f32 %v75, %v605
    %v608 = vtanh.pop %v607
    %v609 = vsub.f32 1.0, %v598
    %611 = vrot.lane.b32.xlu0 %v608, 96
    %v612 = vpop.permute.xlu0 %611
    %v614 = vmul.f32 %v609, %v612
    %v615 = vrot.slane %v549, 6
    %v617 = vmul.f32 %v598, %v615
    %v618 = vadd.f32 %v614, %v617
    %621 = vrot.lane.b32.xlu0 %v279, 32
    %v622 = vpop.permute.xlu0 %621
    %624 = vrot.lane.b32.xlu0 %v348, 64
    %v625 = vpop.permute.xlu0 %624
    %629 = vrot.lane.b32.xlu0 %v551, 32
    %v630 = vpop.permute.xlu0 %629
    %v633 = vrot.slane %v618, 6
    %634 = vrot.lane.b32.xlu0 %v633, 64
    %v635 = vpop.permute.xlu0 %634
    %v637 = vsel %vm78, %v143, %v210
    %vm638 = vcmask 523264
    %v639 = vsel %vm638, %v637, %v622
    %vm640 = vcmask 785408
    %v641 = vsel %vm640, %v639, %v625
    %v642 = vsel %vm78, %v415, %v482
    %v643 = vsel %vm638, %v642, %v630
    %v644 = vsel %vm640, %v643, %v635
    %v647 = vrot.slane %v644, 6
    %vm648 = vcmask 1041408
    %v649 = vsel %vm648, %v641, %v647
    %651 = vst [vmem:[%s4] sm:$0xf] %v649
    %652 = vrot.lane.b32.xlu0 %v618, 96
    %v653 = vpop.permute.xlu0 %652
    %vm655 = vcmask 261126
    %656 = vst.msk [vmem:[#allocation5 - $0x6] sm:$0xc0] %vm655, %v653
    // Predicated region
    $region22: #{_encoder_forward.1} parent=1 // pred_check
      _
    $region23: #{_encoder_forward.1} parent=1 // pred_check_branch
      %658 = sbr.rel (0) target = $region25
    $region24: #{_encoder_forward.1} parent=1 // pred_region
      _
    $region25: #{_encoder_forward.1} parent=1 // pred_fallthru
      _
    // Predicated region
    $region26: #{_encoder_forward.1} parent=1 // pred_check
      _
    $region27: #{_encoder_forward.1} parent=1 // pred_check_branch
      %660 = sbr.rel (0) target = $region29
    $region28: #{_encoder_forward.1} parent=1 // pred_region
      %662 = vsyncadd [#allocation4], 0
      %s664 = sshll.u32 [#allocation5], 4
      %s665 = int_to_ptr.vmem [resolvable:$true] %s664
      %s666 = sshll.u32 %s5, 4
      %s667 = int_to_ptr.hbm [resolvable:$true] %s666
      %669 = dma.vmem_to_hbm [thread:$0]  %s665, 32, %s667, [#allocation4]
    $region29: #{_encoder_forward.1} parent=1 // pred_fallthru
      _
    // Predicated region
    $region30: #{_encoder_forward.1} parent=1 // pred_check
      _
    $region31: #{_encoder_forward.1} parent=1 // pred_check_branch
      %671 = sbr.rel (0) target = $region33
    $region32: #{_encoder_forward.1} parent=1 // pred_region
      _
    $region33: #{_encoder_forward.1} parent=1 // pred_fallthru
      _
    // Predicated region
    $region34: #{_encoder_forward.1} parent=1 // pred_check
      _
    $region35: #{_encoder_forward.1} parent=1 // pred_check_branch
      %673 = sbr.rel (0) target = $region37
    $region36: #{_encoder_forward.1} parent=1 // pred_region
      %675 = dma.done [#allocation4], 32
    $region37: #{_encoder_forward.1} parent=1 // pred_fallthru
      _
    %676 = vsyncpa [#allocation3], 1
    %677 = vsyncpa [#allocation4], 1

</llo_original>
